<compile_context>
chip_gen: v7x
topology: tpu7x:2x2x1
jax: 0.10.0
libtpu: 0.0.40
codegen_flags: <defaults>
</compile_context>

<pallas_src>
import functools
import math

import jax
import jax.numpy as jnp
from jax.experimental import pallas as pl
from jax.experimental.pallas import tpu as pltpu


# ---------------------------------------------------------------------------
# Kernels
# ---------------------------------------------------------------------------
def _mean_abs_kernel(x_ref, o_ref, *, inv_r):
    # x_ref block: (bb, R, tl); o_ref block: (bb, 1, tl).
    acc = jnp.sum(jnp.abs(x_ref[...]).astype(jnp.float32), axis=1, keepdims=True)
    o_ref[...] = (acc * inv_r).astype(o_ref.dtype)


def _mean_abs_kernel_rtiled(x_ref, o_ref, acc_ref, *, inv_r, r_total, r_tile):
    # x_ref block: (1, r_tile, tl); o_ref block: (1, 1, tl); acc f32 scratch.
    k = pl.program_id(2)

    @pl.when(k == 0)
    def _():
        acc_ref[...] = jnp.zeros_like(acc_ref)

    x = jnp.abs(x_ref[...]).astype(jnp.float32)
    if r_total % r_tile != 0:
        # Last reduction block is partial: mask garbage rows (they would
        # otherwise be summed into the accumulator).
        row = jax.lax.broadcasted_iota(jnp.int32, x.shape, 1) + k * r_tile
        x = jnp.where(row < r_total, x, 0.0)
    acc_ref[...] += jnp.sum(x, axis=1, keepdims=True)

    @pl.when(k == pl.num_programs(2) - 1)
    def _():
        o_ref[...] = (acc_ref[...] * inv_r).astype(o_ref.dtype)


# ---------------------------------------------------------------------------
# Tiling plan
# ---------------------------------------------------------------------------
def _vmem_capacity_bytes():
    try:
        return pltpu.get_tpu_info().vmem_capacity_bytes
    except Exception:  # conservative fallback = v7x per-TensorCore VMEM
        return 64 << 20


def _choose_plan(B, R, L, itemsize):
    cap = _vmem_capacity_bytes()
    budget = min(cap // 2, 48 << 20)   # what the pipeline buffers may use
    target = 4 << 20                   # ~4 MiB input block amortises step cost
    lane_full = pl.cdiv(L, 128) * 128

    def fits(bb, rr, tl):
        in_b = 2 * bb * rr * tl * itemsize   # double-buffered input
        out_b = 2 * bb * tl * itemsize       # double-buffered output
        acc_b = bb * tl * 4                  # f32 accumulator (worst case)
        return in_b + out_b + acc_b <= budget

    if fits(1, R, 128):
        # Single-pass: whole reduced axis resident in each block.
        tl = 128
        while (tl < lane_full and tl < 8192 and fits(1, R, tl * 2)
               and R * tl * itemsize < target):
            tl *= 2
        tl = min(tl, lane_full)
        bb = 1
        while bb < B and fits(bb * 2, R, tl) and bb * R * tl * itemsize < target:
            bb *= 2
        return ("single", min(bb, B), R, tl, cap)

    # Reduced axis too large for VMEM even at a 128-lane tile: tile R too.
    tl = 128
    rt = 8
    while rt < R and fits(1, rt * 2, tl) and rt * tl * itemsize < target:
        rt *= 2
    rt = min(rt, pl.cdiv(R, 8) * 8)
    return ("rtiled", 1, rt, tl, cap)


def _vmem_limit(cap, needed):
    # v5e's default scoped limit is only 16 MiB -> always set it explicitly,
    # with headroom, but never more than 3/4 of physical VMEM.
    return int(min(cap * 3 // 4, max(32 << 20, needed + (8 << 20))))


# ---------------------------------------------------------------------------
# Wrapper
# ---------------------------------------------------------------------------
def norm_reducer(x, dim=1):
    """Pallas equivalent of NormReducer(dim): x.abs().mean(dim)."""
    ndim = x.ndim
    if ndim < 2:
        # TODO(synk): 1-D input needs a pure lane-axis reduction kernel.
        raise NotImplementedError("norm_reducer requires x.ndim >= 2")

    dim = dim % ndim
    if dim == ndim - 1:
        # TODO(synk): add an in-kernel lane-axis reduction to avoid this
        # one-off XLA transpose when reducing over the last dim.
        x = jnp.swapaxes(x, -1, -2)
        dim = ndim - 2

    out_shape_final = x.shape[:dim] + x.shape[dim + 1:]
    B = math.prod(x.shape[:dim])
    R = x.shape[dim]
    L = math.prod(x.shape[dim + 1:])
    x3 = x.reshape(B, R, L)

    itemsize = jnp.dtype(x.dtype).itemsize
    plan, bb, rr, tl, cap = _choose_plan(B, R, L, itemsize)
    inv_r = 1.0 / R

    if plan == "single":
        grid = (pl.cdiv(B, bb), pl.cdiv(L, tl))
        needed = 2 * bb * R * tl * itemsize + 2 * bb * tl * itemsize
        out3 = pl.pallas_call(
            functools.partial(_mean_abs_kernel, inv_r=inv_r),
            out_shape=jax.ShapeDtypeStruct((B, 1, L), x.dtype),
            grid_spec=pltpu.PrefetchScalarGridSpec(
                num_scalar_prefetch=0,
                grid=grid,
                in_specs=[pl.BlockSpec((bb, R, tl), lambda i, j: (i, 0, j))],
                out_specs=pl.BlockSpec((bb, 1, tl), lambda i, j: (i, 0, j)),
            ),
            compiler_params=pltpu.CompilerParams(
                dimension_semantics=("parallel", "parallel"),
                vmem_limit_bytes=_vmem_limit(cap, needed),
            ),
        )(x3)
    else:
        grid = (B, pl.cdiv(L, tl), pl.cdiv(R, rr))
        needed = 2 * rr * tl * itemsize + 2 * tl * itemsize + tl * 4
        out3 = pl.pallas_call(
            functools.partial(_mean_abs_kernel_rtiled, inv_r=inv_r,
                              r_total=R, r_tile=rr),
            out_shape=jax.ShapeDtypeStruct((B, 1, L), x.dtype),
            grid_spec=pltpu.PrefetchScalarGridSpec(
                num_scalar_prefetch=0,
                grid=grid,
                in_specs=[pl.BlockSpec((1, rr, tl), lambda n, j, k: (n, k, j))],
                out_specs=pl.BlockSpec((1, 1, tl), lambda n, j, k: (n, 0, j)),
                scratch_shapes=[pltpu.VMEM((1, 1, tl), jnp.float32)],
            ),
            compiler_params=pltpu.CompilerParams(
                dimension_semantics=("parallel", "parallel", "arbitrary"),
                vmem_limit_bytes=_vmem_limit(cap, needed),
            ),
        )(x3)

    return out3.reshape(out_shape_final)


if __name__ == "__main__":
    key = jax.random.PRNGKey(0)

    # Primary check: small NCHW conv-style activation, channel reduction.
    N, C, H, W = 2, 4, 16, 16
    x = jax.random.normal(key, (N, C, H, W), dtype=jnp.float32)
    out = jax.block_until_ready(norm_reducer(x, dim=1))
    ref = jnp.mean(jnp.abs(x), axis=1)
    assert out.shape == (N, H, W)
    assert jnp.allclose(out, ref, atol=1e-6, rtol=1e-6)

    # Secondary check: non-128-aligned spatial extent exercises the masked
    # partial-block path (no host-side padding anymore).
    x2 = jax.random.normal(jax.random.PRNGKey(0), (2, 3, 5, 7), dtype=jnp.float32)
    out2 = jax.block_until_ready(norm_reducer(x2, dim=1))
    ref2 = jnp.mean(jnp.abs(x2), axis=1)
    assert out2.shape == (2, 5, 7)
    assert jnp.allclose(out2, ref2, atol=1e-6, rtol=1e-6)

    print("KERNEL_OK")
</pallas_src>

<mosaic_0001>
module attributes {stable_mosaic.version = 11 : i64} {
  func.func @_mean_abs_kernel(%arg0: i32, %arg1: i32, %arg2: memref<2x4x256xf32, #tpu.memory_space<vmem>>, %arg3: memref<2x1x256xf32, #tpu.memory_space<vmem>>) attributes {dimension_semantics = [#tpu.dimension_semantics<parallel>, #tpu.dimension_semantics<parallel>], iteration_bounds = array<i64: 1, 1>, scalar_prefetch = 0 : i64, scratch_operands = 0 : i64, tpu.core_type = #tpu.core_type<tc>, window_params = [{transform_indices = @transform_0, window_bounds = array<i64: 2, 4, 256>}, {transform_indices = @transform_1, window_bounds = array<i64: 2, 1, 256>}]} {
    %c0 = arith.constant 0 : index
    %c0_0 = arith.constant 0 : index
    %c0_1 = arith.constant 0 : index
    %0 = vector.load %arg2[%c0, %c0_0, %c0_1] : memref<2x4x256xf32, #tpu.memory_space<vmem>>, vector<2x4x256xf32>
    %1 = math.absf %0 : vector<2x4x256xf32>
    %cst = arith.constant dense<0.000000e+00> : vector<2x256xf32>
    %2 = vector.multi_reduction <add>, %1, %cst [1] : vector<2x4x256xf32> to vector<2x256xf32>
    %3 = vector.shape_cast %2 : vector<2x256xf32> to vector<2x1x256xf32>
    %cst_2 = arith.constant 2.500000e-01 : f32
    %4 = vector.broadcast %cst_2 : f32 to vector<2x1x256xf32>
    %5 = arith.mulf %3, %4 : vector<2x1x256xf32>
    %c0_3 = arith.constant 0 : index
    %c0_4 = arith.constant 0 : index
    %c0_5 = arith.constant 0 : index
    %6 = vector.load %arg3[%c0_3, %c0_4, %c0_5] : memref<2x1x256xf32, #tpu.memory_space<vmem>>, vector<2x1x256xf32>
    tpu.vector_store %arg3[%c0_3, %c0_4, %c0_5], %5 {strides = array<i32>} : memref<2x1x256xf32, #tpu.memory_space<vmem>>, vector<2x1x256xf32>,
    return
  }
  func.func @transform_0(%arg0: i32, %arg1: i32) -> (i32, i32, i32) {
    %c0_i32 = arith.constant 0 : i32
    %c0_i32_0 = arith.constant 0 : i32
    return %arg0, %c0_i32, %arg1 : i32, i32, i32
  }
  func.func @transform_1(%arg0: i32, %arg1: i32) -> (i32, i32, i32) {
    %c0_i32 = arith.constant 0 : i32
    %c0_i32_0 = arith.constant 0 : i32
    return %arg0, %c0_i32, %arg1 : i32, i32, i32
  }
}

</mosaic_0001>

<llo_original>
// kernel: tpu_custom_call.1
$region0: #{tpu_custom_call.1}
  #allocation0 [shape = 'u32[]', space=smem, size = 0x4, offset = 0x4, fixed_abs, tag = 'smem constant byte address 0x4 - core index']
  #allocation1 [shape = 'u32[144,128]{1,0:T(1,128)}', space=vmem, size = 0x12000, scoped, tag = 'internal scratch']
  %s0 = inlined_call_operand.hbm [shape: f32[2,4,256], index: 0, kind: input, shape index: {}]
  %s1 = inlined_call_operand.hbm [shape: f32[2,1,256], index: 1, kind: output, shape index: {}]
  %s2 = sld [smem:[#allocation0]]
  $region18: #{tpu_custom_call.1} parent=0
    _
  %s4 = ssub.s32 1, %s2
  %s5 = scalar_select 0, %s4, %s2
  $region1: #{tpu_custom_call.1} parent=0
    #allocation2 [shape = 'u8[8192]{0}', space=vmem, size = 0x2000, scoped, tag = 'input window, operand 0, single buffered']
    #allocation3 [shape = 's32[1]{0}', space=sflag, size = 0x4, scoped, tag = 'scoped memory for tpu_custom_call.1']
    #allocation4 [shape = 's32[1]{0}', space=sflag, size = 0x4, scoped, tag = 'scoped memory for tpu_custom_call.1']
    #allocation5 [shape = 'u8[2048]{0}', space=vmem, size = 0x800, scoped, tag = 'output window, operand 0, single buffered']
    %6 = vsyncpa [#allocation3], 0
    %7 = vsyncpa [#allocation4], 0
    // Predicated region
    $region2: #{tpu_custom_call.1} parent=1 // pred_check
      _
    $region3: #{tpu_custom_call.1} parent=1 // pred_check_branch
      %9 = sbr.rel (0) target = $region5
    $region4: #{tpu_custom_call.1} parent=1 // pred_region
      %s11 = ssub.s32 256, 256
      %12 = vsyncadd [#allocation3], %s11
      %s13 = sshll.u32 [#allocation2], 4
      %s14 = int_to_ptr.vmem [resolvable:$true] %s13
      %19 = dma.hbm_to_vmem [thread:$0]  %s0, 256, %s14, [#allocation3], 128, 128, 8
    $region5: #{tpu_custom_call.1} parent=1 // pred_fallthru
      _
    // Predicated region
    $region6: #{tpu_custom_call.1} parent=1 // pred_check
      _
    $region7: #{tpu_custom_call.1} parent=1 // pred_check_branch
      %21 = sbr.rel (0) target = $region9
    $region8: #{tpu_custom_call.1} parent=1 // pred_region
      %22 = dma.done [#allocation3], 256
    $region9: #{tpu_custom_call.1} parent=1 // pred_fallthru
      _
    %v23 = vld [vmem:[#allocation2] sm:$0xff]
    %v24 = vld [vmem:[#allocation2 + $0x8] sm:$0xff]
    %v25 = vand.u32 2147483647, %v23
    %v26 = vand.u32 2147483647, %v24
    %v29 = vcombine.high %v25, %v25
    %v30 = vcombine.high %v26, %v26
    %vm33 = vcmask 1043456
    %v34 = vsel %vm33, %v25, 0.0
    %v35 = vrot.slane %v34, 4
    %v36 = vadd.f32 %v34, %v35
    %v37 = vrot.slane %v36, 2
    %v38 = vadd.f32 %v36, %v37
    %v39 = vrot.slane %v38, 1
    %v40 = vadd.f32 %v38, %v39
    %v41 = vsel %vm33, %v29, 0.0
    %v42 = vrot.slane %v41, 4
    %v43 = vadd.f32 %v41, %v42
    %v44 = vrot.slane %v43, 2
    %v45 = vadd.f32 %v43, %v44
    %v46 = vrot.slane %v45, 1
    %v47 = vadd.f32 %v45, %v46
    %v48 = vsel %vm33, %v26, 0.0
    %v49 = vrot.slane %v48, 4
    %v50 = vadd.f32 %v48, %v49
    %v51 = vrot.slane %v50, 2
    %v52 = vadd.f32 %v50, %v51
    %v53 = vrot.slane %v52, 1
    %v54 = vadd.f32 %v52, %v53
    %v55 = vsel %vm33, %v30, 0.0
    %v56 = vrot.slane %v55, 4
    %v57 = vadd.f32 %v55, %v56
    %v58 = vrot.slane %v57, 2
    %v59 = vadd.f32 %v57, %v58
    %v60 = vrot.slane %v59, 1
    %v61 = vadd.f32 %v59, %v60
    %v62 = vmul.f32 %v40, 0.25
    %v63 = vmul.f32 %v47, 0.25
    %v64 = vmul.f32 %v54, 0.25
    %v65 = vmul.f32 %v61, 0.25
    %v70 = vcombine.low %v62, %v63
    %v72 = vunpack.c.l.s4 1966171168
    %v73 = vunpack.c.0.s8 %v72
    %v74 = vlaneseq
    %v75 = vshrl.u32 %v74, 7
    %v76 = vsub.s32 %v73, %v75
    %v77 = vrot.slane %v70, %v76
    %v79 = vunpack.c.l.s4 1966171168
    %v80 = vunpack.c.0.s8 %v79
    %v81 = vlaneseq
    %v82 = vshrl.u32 %v81, 7
    %v83 = vsub.s32 %v80, %v82
    %v84 = vrot.slane %v77, %v83
    %v85 = vcombine.low %v64, %v65
    %v87 = vunpack.c.l.s4 1966171168
    %v88 = vunpack.c.0.s8 %v87
    %v89 = vlaneseq
    %v90 = vshrl.u32 %v89, 7
    %v91 = vsub.s32 %v88, %v90
    %v92 = vrot.slane %v85, %v91
    %v94 = vunpack.c.l.s4 1966171168
    %v95 = vunpack.c.0.s8 %v94
    %v96 = vlaneseq
    %v97 = vshrl.u32 %v96, 7
    %v98 = vsub.s32 %v95, %v97
    %v99 = vrot.slane %v92, %v98
    %v102 = vlaneseq
    %vm103 = vcmp.ge.s32.totalorder %v102, 0
    %vm104 = vcmp.lt.s32.totalorder %v102, 256
    %vm105 = vmand %vm103, %vm104
    %106 = vst.msk [vmem:[#allocation5] sm:$0x3] %vm105, %v84
    %107 = vst.msk [vmem:[#allocation5 + $0x2] sm:$0x3] %vm105, %v99
    // Predicated region
    $region10: #{tpu_custom_call.1} parent=1 // pred_check
      _
    $region11: #{tpu_custom_call.1} parent=1 // pred_check_branch
      %109 = sbr.rel (0) target = $region13
    $region12: #{tpu_custom_call.1} parent=1 // pred_region
      %s111 = ssub.s32 64, 64
      %112 = vsyncadd [#allocation4], %s111
      %s113 = sshll.u32 [#allocation5], 4
      %s114 = int_to_ptr.vmem [resolvable:$true] %s113
      %119 = dma.vmem_to_hbm [thread:$0]  %s114, 64, %s1, [#allocation4], 32, 32, 2
    $region13: #{tpu_custom_call.1} parent=1 // pred_fallthru
      _
    // Predicated region
    $region14: #{tpu_custom_call.1} parent=1 // pred_check
      _
    $region15: #{tpu_custom_call.1} parent=1 // pred_check_branch
      %121 = sbr.rel (0) target = $region17
    $region16: #{tpu_custom_call.1} parent=1 // pred_region
      %122 = dma.done [#allocation4], 64
    $region17: #{tpu_custom_call.1} parent=1 // pred_fallthru
      _
    %123 = vsyncpa [#allocation3], 1
    %124 = vsyncpa [#allocation4], 1

</llo_original>
